<compile_context>
chip_gen: v7x
topology: tpu7x:2x2x1
jax: 0.10.0
libtpu: 0.0.40
codegen_flags: <defaults>
</compile_context>

<pallas_src>
import jax
import jax.numpy as jnp
from jax.experimental import pallas as pl
from jax.experimental.pallas import tpu as pltpu


def _round_up(n, m):
    return ((n + m - 1) // m) * m


def _vmem_budget_bytes():
    """Per-generation VMEM budget: physical capacity minus compiler headroom,
    capped at 100 MiB (v5e/v6e: 128 MiB physical, v7x: 64 MiB per TC)."""
    try:
        cap = int(pltpu.get_tpu_info().vmem_capacity_bytes)
    except Exception:
        cap = 64 << 20  # conservative: assume v7x-sized VMEM
    return max(32 << 20, min(cap - (12 << 20), 100 << 20))


def _maybe_single_buffered(block_shape, index_map):
    """BlockSpec for a block with a constant index map (weight / bias): request
    a single VMEM buffer so only ONE copy of the weight is resident.
    Returns (spec, buffer_count) so the caller budgets VMEM correctly even if
    pipeline_mode is unavailable (no silent 2x footprint surprise)."""
    if hasattr(pl, "Buffered"):
        return pl.BlockSpec(block_shape, index_map,
                            pipeline_mode=pl.Buffered(1)), 1
    return pl.BlockSpec(block_shape, index_map), 2


# ---------------- path A: weight resident in VMEM, single pass ---------------

def _logprob_resident_kernel(x_ref, w_ref, b_ref, o_ref):
    # x_ref: (TM, d_model) f32 -> cast to bf16 post-DMA (fast MXU path)
    x = x_ref[...].astype(w_ref.dtype)
    logits = jnp.dot(x, w_ref[...], preferred_element_type=jnp.float32) + b_ref[...]
    m = jnp.max(logits, axis=-1, keepdims=True)
    shifted = logits - m
    lse = jnp.log(jnp.sum(jnp.exp(shifted), axis=-1, keepdims=True))
    o_ref[...] = (shifted - lse).astype(o_ref.dtype)


# ---------------- path B: vocab-tiled two-pass (online LSE) ------------------

def _lse_kernel(x_ref, w_ref, b_ref, lse_ref, m_sc, l_sc):
    j = pl.program_id(1)

    @pl.when(j == 0)
    def _():
        m_sc[...] = jnp.full(m_sc.shape, -jnp.inf, dtype=m_sc.dtype)
        l_sc[...] = jnp.zeros(l_sc.shape, dtype=l_sc.dtype)

    x = x_ref[...].astype(w_ref.dtype)
    logits = jnp.dot(x, w_ref[...], preferred_element_type=jnp.float32) + b_ref[...]
    m_prev = m_sc[...]
    m_new = jnp.maximum(m_prev, jnp.max(logits, axis=-1, keepdims=True))
    l_sc[...] = (l_sc[...] * jnp.exp(m_prev - m_new)
                 + jnp.sum(jnp.exp(logits - m_new), axis=-1, keepdims=True))
    m_sc[...] = m_new

    @pl.when(j == pl.num_programs(1) - 1)
    def _():
        lse_ref[...] = m_sc[...] + jnp.log(l_sc[...])


def _writeout_kernel(x_ref, w_ref, b_ref, lse_ref, o_ref):
    x = x_ref[...].astype(w_ref.dtype)
    logits = jnp.dot(x, w_ref[...], preferred_element_type=jnp.float32) + b_ref[...]
    o_ref[...] = (logits - lse_ref[...]).astype(o_ref.dtype)


# ------------------------------- wrapper -------------------------------------

def word_prob_generator(x, weight, bias, *, compute_dtype=jnp.bfloat16,
                        out_dtype=None, vocab_block=None,
                        force_vocab_tiled=False):
    """
    log_softmax(x @ weight.T + bias, axis=-1)  ==  WordProbGenerator.forward(x)

    x:      (batch, seq, d_model)
    weight: (vocab, d_model)   -- nn.Linear weight layout
    bias:   (vocab,)
    """
    batch, seq, d_model = x.shape
    vocab = weight.shape[0]
    out_dtype = x.dtype if out_dtype is None else out_dtype
    out_bytes = jnp.dtype(out_dtype).itemsize
    cd_bytes = jnp.dtype(compute_dtype).itemsize
    M = batch * seq

    budget = _vmem_budget_bytes()

    # Row tile: bound the live f32 logits working set (~<=4 MiB), prefer
    # MXU-friendly multiples, never exceed the problem, and keep >=2 row tiles
    # when possible so the "parallel" row axis feeds both v7x TensorCores.
    logits_budget = 4 << 20
    tm_cap = max(8, logits_budget // (4 * vocab))
    tile_m = None
    for cand in (512, 256, 128):
        if tm_cap >= cand:
            tile_m = cand
            break
    if tile_m is None:
        tile_m = max(8, (tm_cap // 8) * 8)
    tile_m = min(tile_m, _round_up(max(1, pl.cdiv(M, 2)), 8))

    x2d = x.reshape(M, d_model)                      # no cast/pad HBM pass
    w = weight.T.astype(compute_dtype)               # one-time weight prep
    b = bias.astype(jnp.float32).reshape(1, vocab)

    grid_m = pl.cdiv(M, tile_m)

    # ---- path A: weight resident, single pass over the rows ----------------
    w_spec, w_bufs = _maybe_single_buffered((d_model, vocab), lambda i: (0, 0))
    b_spec, b_bufs = _maybe_single_buffered((1, vocab), lambda i: (0, 0))
    resident_bytes = (w_bufs * d_model * vocab * cd_bytes
                      + b_bufs * vocab * 4
                      + 2 * tile_m * d_model * 4       # x tiles (f32, dbl-buf)
                      + 2 * tile_m * vocab * out_bytes  # out tiles (dbl-buf)
                      + tile_m * vocab * 4)             # live f32 logits
    use_resident = (not force_vocab_tiled) and resident_bytes <= budget

    if use_resident:
        vmem_limit = int(min(budget, max(32 << 20, resident_bytes + (8 << 20))))
        out = pl.pallas_call(
            _logprob_resident_kernel,
            out_shape=jax.ShapeDtypeStruct((M, vocab), out_dtype),
            grid_spec=pltpu.PrefetchScalarGridSpec(
                num_scalar_prefetch=0,
                grid=(grid_m,),
                in_specs=[
                    pl.BlockSpec((tile_m, d_model), lambda i: (i, 0)),
                    w_spec,
                    b_spec,
                ],
                out_specs=pl.BlockSpec((tile_m, vocab), lambda i: (i, 0)),
            ),
            compiler_params=pltpu.CompilerParams(
                dimension_semantics=("parallel",),
                vmem_limit_bytes=vmem_limit,
            ),
        )(x2d, w, b)
        return out.reshape(batch, seq, vocab)

    # ---- path B: vocab-tiled two-pass (pass 1: online LSE, pass 2: write) ---
    def _tiled_bytes(tv):
        return (2 * d_model * tv * cd_bytes      # weight chunk (dbl-buf)
                + 2 * tv * 4                     # bias chunk
                + 2 * tile_m * d_model * 4       # x tiles
                + 2 * tile_m * tv * out_bytes    # out tiles
                + tile_m * tv * 4                # live f32 logits
                + 6 * tile_m * 4)                # lse in/out + m/l scratch

    vocab128 = _round_up(vocab, 128)
    if vocab_block is not None:
        tile_v = max(128, _round_up(min(vocab_block, vocab128), 128))
    else:
        cands = [c for c in (2048, 1024, 512, 256, 128) if c <= vocab128]
        if not cands:
            cands = [vocab128]
        tile_v = cands[-1]
        for c in cands:
            if _tiled_bytes(c) <= budget:
                tile_v = c
                break

    vocab_p = _round_up(vocab, tile_v)
    if vocab_p != vocab:
        # zero weight cols + very negative bias: padded columns add exp(-inf)=0
        # to the LSE; padded *output* columns are never stored (Pallas masks the
        # partial tail output block), so nothing is sliced afterwards.
        w = jnp.pad(w, ((0, 0), (0, vocab_p - vocab)))
        b = jnp.pad(b, ((0, 0), (0, vocab_p - vocab)), constant_values=-1e30)
    grid_v = vocab_p // tile_v
    vmem_limit = int(min(budget, max(32 << 20, _tiled_bytes(tile_v) + (8 << 20))))

    lse = pl.pallas_call(
        _lse_kernel,
        out_shape=jax.ShapeDtypeStruct((M, 1), jnp.float32),
        grid_spec=pltpu.PrefetchScalarGridSpec(
            num_scalar_prefetch=0,
            grid=(grid_m, grid_v),
            in_specs=[
                pl.BlockSpec((tile_m, d_model), lambda i, j: (i, 0)),
                pl.BlockSpec((d_model, tile_v), lambda i, j: (0, j)),
                pl.BlockSpec((1, tile_v), lambda i, j: (0, j)),
            ],
            out_specs=pl.BlockSpec((tile_m, 1), lambda i, j: (i, 0)),
            scratch_shapes=[pltpu.VMEM((tile_m, 1), jnp.float32),
                            pltpu.VMEM((tile_m, 1), jnp.float32)],
        ),
        compiler_params=pltpu.CompilerParams(
            dimension_semantics=("parallel", "arbitrary"),
            vmem_limit_bytes=vmem_limit,
        ),
    )(x2d, w, b)

    out = pl.pallas_call(
        _writeout_kernel,
        out_shape=jax.ShapeDtypeStruct((M, vocab), out_dtype),
        grid_spec=pltpu.PrefetchScalarGridSpec(
            num_scalar_prefetch=0,
            grid=(grid_m, grid_v),
            in_specs=[
                pl.BlockSpec((tile_m, d_model), lambda i, j: (i, 0)),
                pl.BlockSpec((d_model, tile_v), lambda i, j: (0, j)),
                pl.BlockSpec((1, tile_v), lambda i, j: (0, j)),
                pl.BlockSpec((tile_m, 1), lambda i, j: (i, 0)),
            ],
            out_specs=pl.BlockSpec((tile_m, tile_v), lambda i, j: (i, j)),
        ),
        compiler_params=pltpu.CompilerParams(
            dimension_semantics=("parallel", "arbitrary"),
            vmem_limit_bytes=vmem_limit,
        ),
    )(x2d, w, b, lse)
    return out.reshape(batch, seq, vocab)


if __name__ == "__main__":
    batch, seq, d_model = 2, 9, 32   # M=18 -> exercises the masked tail row block

    key = jax.random.PRNGKey(0)
    kx, kw, kb = jax.random.split(key, 3)

    def make_params(vocab, kw_, kb_):
        bound = 1.0 / (d_model ** 0.5)
        weight = jax.random.uniform(kw_, (vocab, d_model), minval=-bound,
                                    maxval=bound, dtype=jnp.float32)
        bias = jax.random.uniform(kb_, (vocab,), minval=-bound,
                                  maxval=bound, dtype=jnp.float32)
        return weight, bias

    def reference_bf16(x, weight, bias):
        # what the MXU computes: bf16-rounded inputs, f32 accumulation
        xb = x.astype(jnp.bfloat16).astype(jnp.float32)
        wb = weight.T.astype(jnp.bfloat16).astype(jnp.float32)
        return jax.nn.log_softmax(xb @ wb + bias, axis=-1)

    x = jax.random.normal(kx, (batch, seq, d_model), dtype=jnp.float32)

    # ---- path A: weight-resident single pass (vocab = 128) ------------------
    vocab_a = 128
    w_a, b_a = make_params(vocab_a, kw, kb)
    out_a = jax.block_until_ready(word_prob_generator(x, w_a, b_a))
    assert out_a.shape == (batch, seq, vocab_a)
    assert bool(jnp.all(jnp.isfinite(out_a)))
    assert jnp.allclose(out_a, reference_bf16(x, w_a, b_a), atol=1e-4, rtol=1e-4)
    ref_f32 = jax.nn.log_softmax(x @ w_a.T + b_a, axis=-1)
    assert jnp.allclose(out_a, ref_f32, atol=5e-2, rtol=0)

    # ---- path B: vocab-tiled two-pass with online LSE (forced at small shape;
    #      vocab=320 exercises vocab padding + masked partial output tile) ----
    vocab_b = 320
    kw2, kb2 = jax.random.split(kw)
    w_b, b_b = make_params(vocab_b, kw2, kb2)
    out_b = jax.block_until_ready(
        word_prob_generator(x, w_b, b_b, force_vocab_tiled=True, vocab_block=128))
    assert out_b.shape == (batch, seq, vocab_b)
    assert bool(jnp.all(jnp.isfinite(out_b)))
    assert jnp.allclose(out_b, reference_bf16(x, w_b, b_b), atol=1e-4, rtol=1e-4)

    print("KERNEL_OK")
</pallas_src>

<mosaic_0001>
module attributes {stable_mosaic.version = 11 : i64} {
  func.func @_logprob_resident_kernel(%arg0: i32, %arg1: memref<16x32xf32, #tpu.memory_space<vmem>>, %arg2: memref<32x128xbf16, #tpu.memory_space<vmem>>, %arg3: memref<1x128xf32, #tpu.memory_space<vmem>>, %arg4: memref<16x128xf32, #tpu.memory_space<vmem>>) attributes {dimension_semantics = [#tpu.dimension_semantics<parallel>], iteration_bounds = array<i64: 2>, scalar_prefetch = 0 : i64, scratch_operands = 0 : i64, tpu.core_type = #tpu.core_type<tc>, window_params = [{transform_indices = @transform_0, window_bounds = array<i64: 16, 32>}, {pipeline_mode = #tpu.pipeline_mode<synchronous>, transform_indices = @transform_1, window_bounds = array<i64: 32, 128>}, {pipeline_mode = #tpu.pipeline_mode<synchronous>, transform_indices = @transform_2, window_bounds = array<i64: 1, 128>}, {transform_indices = @transform_3, window_bounds = array<i64: 16, 128>}]} {
    %c0 = arith.constant 0 : index
    %c0_0 = arith.constant 0 : index
    %0 = vector.load %arg1[%c0, %c0_0] : memref<16x32xf32, #tpu.memory_space<vmem>>, vector<16x32xf32>
    %1 = arith.truncf %0 : vector<16x32xf32> to vector<16x32xbf16>
    %c0_1 = arith.constant 0 : index
    %c0_2 = arith.constant 0 : index
    %2 = vector.load %arg2[%c0_1, %c0_2] : memref<32x128xbf16, #tpu.memory_space<vmem>>, vector<32x128xbf16>
    %cst = arith.constant dense<0.000000e+00> : vector<16x128xf32>
    %3 = tpu.matmul %1, %2, %cst {dimension_numbers = #tpu.dot_dimension_numbers<[1], [0], [0], [1], [0, 0, 1, 1], [], []>} : vector<16x32xbf16>, vector<32x128xbf16>, vector<16x128xf32> -> vector<16x128xf32>
    %c0_3 = arith.constant 0 : index
    %c0_4 = arith.constant 0 : index
    %4 = vector.load %arg3[%c0_3, %c0_4] : memref<1x128xf32, #tpu.memory_space<vmem>>, vector<1x128xf32>
    %5 = vector.broadcast %4 : vector<1x128xf32> to vector<16x128xf32>
    %6 = arith.addf %3, %5 : vector<16x128xf32>
    %cst_5 = arith.constant dense<0xFF800000> : vector<16xf32>
    %7 = vector.multi_reduction <maximumf>, %6, %cst_5 [1] : vector<16x128xf32> to vector<16xf32>
    %8 = vector.shape_cast %7 : vector<16xf32> to vector<16x1xf32>
    %9 = vector.broadcast %8 : vector<16x1xf32> to vector<16x128xf32>
    %10 = arith.subf %6, %9 : vector<16x128xf32>
    %11 = math.exp %10 : vector<16x128xf32>
    %cst_6 = arith.constant dense<0.000000e+00> : vector<16xf32>
    %12 = vector.multi_reduction <add>, %11, %cst_6 [1] : vector<16x128xf32> to vector<16xf32>
    %13 = vector.shape_cast %12 : vector<16xf32> to vector<16x1xf32>
    %14 = math.log %13 : vector<16x1xf32>
    %15 = vector.broadcast %14 : vector<16x1xf32> to vector<16x128xf32>
    %16 = arith.subf %10, %15 : vector<16x128xf32>
    %c0_7 = arith.constant 0 : index
    %c0_8 = arith.constant 0 : index
    %17 = vector.load %arg4[%c0_7, %c0_8] : memref<16x128xf32, #tpu.memory_space<vmem>>, vector<16x128xf32>
    tpu.vector_store %arg4[%c0_7, %c0_8], %16 {strides = array<i32>} : memref<16x128xf32, #tpu.memory_space<vmem>>, vector<16x128xf32>,
    return
  }
  func.func @transform_0(%arg0: i32) -> (i32, i32) {
    %c0_i32 = arith.constant 0 : i32
    %c0_i32_0 = arith.constant 0 : i32
    return %arg0, %c0_i32 : i32, i32
  }
  func.func @transform_1(%arg0: i32) -> (i32, i32) {
    %c0_i32 = arith.constant 0 : i32
    %c0_i32_0 = arith.constant 0 : i32
    %c0_i32_1 = arith.constant 0 : i32
    return %c0_i32, %c0_i32_0 : i32, i32
  }
  func.func @transform_2(%arg0: i32) -> (i32, i32) {
    %c0_i32 = arith.constant 0 : i32
    %c0_i32_0 = arith.constant 0 : i32
    %c0_i32_1 = arith.constant 0 : i32
    return %c0_i32, %c0_i32_0 : i32, i32
  }
  func.func @transform_3(%arg0: i32) -> (i32, i32) {
    %c0_i32 = arith.constant 0 : i32
    %c0_i32_0 = arith.constant 0 : i32
    return %arg0, %c0_i32 : i32, i32
  }
}

</mosaic_0001>

<llo_original>
// kernel: tpu_custom_call.1
$region0: #{tpu_custom_call.1}
  #allocation0 [shape = 'u32[]', space=smem, size = 0x4, offset = 0x4, fixed_abs, tag = 'smem constant byte address 0x4 - core index']
  #allocation1 [shape = 'u32[144,128]{1,0:T(1,128)}', space=vmem, size = 0x12000, scoped, tag = 'internal scratch']
  %s0 = inlined_call_operand.hbm [shape: f32[18,32], index: 0, kind: input, shape index: {}]
  %s1 = inlined_call_operand.hbm [shape: bf16[32,128], index: 1, kind: input, shape index: {}]
  %s2 = inlined_call_operand.vmem [shape: f32[1,128], index: 2, kind: input, shape index: {}]
  %s3 = inlined_call_operand.hbm [shape: f32[18,128], index: 3, kind: output, shape index: {}]
  %s4 = sld [smem:[#allocation0]]
  $region53: #{tpu_custom_call.1} parent=0
    _
  %s6 = ssub.s32 1, %s4
  %s7 = scalar_select 0, %s6, %s4
  $region1: #{tpu_custom_call.1} parent=0
    #allocation2 [shape = 'u8[16384]{0}', space=vmem, size = 0x4000, scoped, tag = 'input window, operand 0']
    #allocation3 [shape = 's32[2]{0}', space=sflag, size = 0x8, scoped, tag = 'scoped memory for tpu_custom_call.1']
    #allocation4 [shape = 's32[2]{0}', space=sflag, size = 0x8, scoped, tag = 'scoped memory for tpu_custom_call.1']
    #allocation5 [shape = 'u8[8192]{0}', space=vmem, size = 0x2000, scoped, tag = 'input window, operand 1, single buffered']
    #allocation6 [shape = 's32[1]{0}', space=sflag, size = 0x4, scoped, tag = 'scoped memory for tpu_custom_call.1']
    #allocation7 [shape = 'u8[16384]{0}', space=vmem, size = 0x4000, scoped, tag = 'output window, operand 0']
    %8 = vsyncpa [#allocation3], 0
    %s9 = scalar_lea.sflag [#allocation3], 1
    %10 = vsyncpa %s9, 0
    %11 = vsyncpa [#allocation6], 0
    %12 = vsyncpa [#allocation4], 0
    %s13 = scalar_lea.sflag [#allocation4], 1
    %14 = vsyncpa %s13, 0
    loop: start=0, step=1, limit=4
    $region2: #{tpu_custom_call.1} parent=1 // loop_pre_header
      _
    $region3: #{tpu_custom_call.1} parent=1 // loop_header
      %s16 = sphi 0, %s20
      %p17 = scmp.ge.s32.totalorder %s16, 4
      %s26 = sphi 0, %s28
      %s29 = sphi 0, %s26
      %s30 = sphi 0, %s29
      %s46 = sphi 0, %s30
      %s50 = sphi 0, %s50
      %s52 = sphi 0, %s50
      %s53 = sphi 0, %s52
      %s67 = sphi 0, %s53
      %s71 = sphi 0, %s71
      %s73 = sphi 0, %s71
      %s74 = sphi 0, %s73
      %s88 = sphi 0, %s74
      %s94 = sphi 0, %s96
      %s97 = sphi 0, %s94
      %s98 = sphi 0, %s97
      %s114 = sphi 0, %s98
    $region4: #{tpu_custom_call.1} parent=1 // loop_header_branch
      %19 = sbr.rel (%p17) target = $region8
    $region5: #{tpu_custom_call.1} parent=1 // loop_body
      %s21 = ssub.s32 %s16, 1
      %s22 = ssub.s32 %s16, 2
      %s23 = sadd.s32 %s16, 1
      %s24 = ssub.s32 %s16, %s23
      %p25 = scmp.eq.s32.totalorder %s24, 0
      %s27 = sadd.s32 %s26, 1
      %s28 = scalar_select %p25, %s26, %s27
      %p31 = pneg %p25
      %p32 = scmp.eq.s32.totalorder %s16, 1
      %p33 = por %p31, %p32
      %p34 = scmp.ne.s32.totalorder %s26, %s29
      %p35 = scmp.eq.s32.totalorder %s16, 0
      %p36 = por %p34, %p35
      %p37 = scmp.ne.s32.totalorder %s26, %s29
      %p38 = scmp.eq.s32.totalorder %s21, 1
      %p39 = por %p37, %p38
      %p40 = scmp.ne.s32.totalorder %s29, %s30
      %p41 = scmp.eq.s32.totalorder %s21, 0
      %p42 = por %p40, %p41
      %p43 = scmp.ne.s32.totalorder %s29, %s30
      %p44 = scmp.eq.s32.totalorder %s22, 1
      %p45 = por %p43, %p44
      %p47 = scmp.ne.s32.totalorder %s30, %s46
      %p48 = scmp.eq.s32.totalorder %s22, 0
      %p49 = por %p47, %p48
      %s51 = sadd.s32 %s50, 1
      %p54 = scmp.eq.s32.totalorder %s16, 1
      %p55 = scmp.ne.s32.totalorder %s50, %s52
      %p56 = scmp.eq.s32.totalorder %s16, 0
      %p57 = por %p55, %p56
      %p58 = scmp.ne.s32.totalorder %s50, %s52
      %p59 = scmp.eq.s32.totalorder %s21, 1
      %p60 = por %p58, %p59
      %p61 = scmp.ne.s32.totalorder %s52, %s53
      %p62 = scmp.eq.s32.totalorder %s21, 0
      %p63 = por %p61, %p62
      %p64 = scmp.ne.s32.totalorder %s52, %s53
      %p65 = scmp.eq.s32.totalorder %s22, 1
      %p66 = por %p64, %p65
      %p68 = scmp.ne.s32.totalorder %s53, %s67
      %p69 = scmp.eq.s32.totalorder %s22, 0
      %p70 = por %p68, %p69
      %s72 = sadd.s32 %s71, 1
      %p75 = scmp.eq.s32.totalorder %s16, 1
      %p76 = scmp.ne.s32.totalorder %s71, %s73
      %p77 = scmp.eq.s32.totalorder %s16, 0
      %p78 = por %p76, %p77
      %p79 = scmp.ne.s32.totalorder %s71, %s73
      %p80 = scmp.eq.s32.totalorder %s21, 1
      %p81 = por %p79, %p80
      %p82 = scmp.ne.s32.totalorder %s73, %s74
      %p83 = scmp.eq.s32.totalorder %s21, 0
      %p84 = por %p82, %p83
      %p85 = scmp.ne.s32.totalorder %s73, %s74
      %p86 = scmp.eq.s32.totalorder %s22, 1
      %p87 = por %p85, %p86
      %p89 = scmp.ne.s32.totalorder %s74, %s88
      %p90 = scmp.eq.s32.totalorder %s22, 0
      %p91 = por %p89, %p90
      %s92 = ssub.s32 %s16, %s23
      %p93 = scmp.eq.s32.totalorder %s92, 0
      %s95 = sadd.s32 %s94, 1
      %s96 = scalar_select %p93, %s94, %s95
      %p99 = pneg %p93
      %p100 = scmp.eq.s32.totalorder %s16, 1
      %p101 = por %p99, %p100
      %p102 = scmp.ne.s32.totalorder %s94, %s97
      %p103 = scmp.eq.s32.totalorder %s16, 0
      %p104 = por %p102, %p103
      %p105 = scmp.ne.s32.totalorder %s94, %s97
      %p106 = scmp.eq.s32.totalorder %s21, 1
      %p107 = por %p105, %p106
      %p108 = scmp.ne.s32.totalorder %s97, %s98
      %p109 = scmp.eq.s32.totalorder %s21, 0
      %p110 = por %p108, %p109
      %p111 = scmp.ne.s32.totalorder %s97, %s98
      %p112 = scmp.eq.s32.totalorder %s22, 1
      %p113 = por %p111, %p112
      %p115 = scmp.ne.s32.totalorder %s98, %s114
      %p116 = scmp.eq.s32.totalorder %s22, 0
      %p117 = por %p115, %p116
      %p118 = scmp.le.s32.totalorder 1, %s16
      %p119 = scmp.lt.s32.totalorder %s16, 3
      %p120 = pnand %p118, %p119
      %p121 = pneg %p120
      // Predicated region
      $region9: #{tpu_custom_call.1} parent=5 // pred_check
        _
      $region10: #{tpu_custom_call.1} parent=5 // pred_check_branch
        %123 = sbr.rel (%p120) target = $region12
      $region11: #{tpu_custom_call.1} parent=5 // pred_region
        %s124 = ssub.s32 %s16, 1
        // Predicated region
        $region13: #{tpu_custom_call.1} parent=11 // pred_check
          %p125 = pneg %p63
        $region14: #{tpu_custom_call.1} parent=11 // pred_check_branch
          %127 = sbr.rel (%p125) target = $region16
        $region15: #{tpu_custom_call.1} parent=11 // pred_region
          %s129 = ssub.s32 256, 256
          %130 = vsyncadd [#allocation6], %s129
          %s131 = sshll.u32 [#allocation5], 4
          %s132 = int_to_ptr.vmem [resolvable:$true] %s131
          %137 = dma.hbm_to_vmem [thread:$0]  %s1, 256, %s132, [#allocation6], 64, 64, 4
        $region16: #{tpu_custom_call.1} parent=11 // pred_fallthru
          _
        // Predicated region
        $region17: #{tpu_custom_call.1} parent=11 // pred_check
          %p138 = pneg %p84
        $region18: #{tpu_custom_call.1} parent=11 // pred_check_branch
          %140 = sbr.rel (%p138) target = $region20
        $region19: #{tpu_custom_call.1} parent=11 // pred_region
          _
        $region20: #{tpu_custom_call.1} parent=11 // pred_fallthru
          _
      $region12: #{tpu_custom_call.1} parent=5 // pred_fallthru
        _
      %p141 = scmp.lt.s32.totalorder %s16, 2
      // Predicated region
      $region21: #{tpu_custom_call.1} parent=5 // pred_check
        %p142 = pneg %p141
      $region22: #{tpu_custom_call.1} parent=5 // pred_check_branch
        %144 = sbr.rel (%p142) target = $region24
      $region23: #{tpu_custom_call.1} parent=5 // pred_region
        // Predicated region
        $region25: #{tpu_custom_call.1} parent=23 // pred_check
          %p145 = pneg %p36
        $region26: #{tpu_custom_call.1} parent=23 // pred_check_branch
          %147 = sbr.rel (%p145) target = $region28
        $region27: #{tpu_custom_call.1} parent=23 // pred_region
          %s148 = sand.u32 %s26, 1
          %s149 = scalar_lea.sflag [#allocation3], %s148
          %s150 = sand.u32 %s26, 1
          %s151 = smul.addr %s150, 16
          %s152 = scalar_lea.vmem [#allocation2], %s151
          %s153 = smul.u32 2, %s16
          %s154 = ssub.s32 3, %s153
          %p155 = scmp.lt.s32.totalorder %s154, 2
          %s156 = scalar_select %p155, %s154, 2
          %s157 = smul.u32 128, %s156
          %s159 = ssub.s32 256, %s157
          %160 = vsyncadd %s149, %s159
          %p161 = scmp.ne.s32.totalorder 0, %s157
          %s162 = smul.addr %s153, 128
          %s163 = scalar_lea.hbm %s0, %s162
          %s164 = smul.u32 8, %s156
          %s165 = sshll.u32 %s152, 4
          %s166 = int_to_ptr.vmem [resolvable:$true] %s165
          %s167 = sshll.u32 %s164, 4
          %171 = dma.hbm_to_vmem [thread:$0]  (%p161), %s163, %s167, %s166, %s149, 128, 128, 8
        $region28: #{tpu_custom_call.1} parent=23 // pred_fallthru
          _
      $region24: #{tpu_custom_call.1} parent=5 // pred_fallthru
        _
      %p172 = scmp.le.s32.totalorder 1, %s16
      %p173 = scmp.lt.s32.totalorder %s16, 3
      %p174 = pnand %p172, %p173
      %p175 = pneg %p174
      // Predicated region
      $region29: #{tpu_custom_call.1} parent=5 // pred_check
        _
      $region30: #{tpu_custom_call.1} parent=5 // pred_check_branch
        %177 = sbr.rel (%p174) target = $region32
      $region31: #{tpu_custom_call.1} parent=5 // pred_region
        %s178 = ssub.s32 %s16, 1
        %s179 = sand.u32 %s29, 1
        %s180 = scalar_lea.sflag [#allocation3], %s179
        %s181 = sand.u32 %s29, 1
        %s182 = smul.addr %s181, 16
        %s183 = scalar_lea.vmem [#allocation2], %s182
        // Predicated region
        $region33: #{tpu_custom_call.1} parent=31 // pred_check
          %p184 = pneg %p42
        $region34: #{tpu_custom_call.1} parent=31 // pred_check_branch
          %186 = sbr.rel (%p184) target = $region36
        $region35: #{tpu_custom_call.1} parent=31 // pred_region
          %187 = dma.done %s180, 256
        $region36: #{tpu_custom_call.1} parent=31 // pred_fallthru
          _
        // Predicated region
        $region37: #{tpu_custom_call.1} parent=31 // pred_check
          %p188 = pneg %p63
        $region38: #{tpu_custom_call.1} parent=31 // pred_check_branch
          %190 = sbr.rel (%p188) target = $region40
        $region39: #{tpu_custom_call.1} parent=31 // pred_region
          %191 = dma.done [#allocation6], 256
        $region40: #{tpu_custom_call.1} parent=31 // pred_fallthru
          _
        %s192 = sand.u32 %s29, 1
        %s193 = scalar_lea.sflag [#allocation3], %s192
        %s194 = sand.u32 %s29, 1
        %s195 = smul.addr %s194, 16
        %s196 = scalar_lea.vmem [#allocation2], %s195
        %p197 = pneg %p42
        %p198 = pneg %p39
        %p199 = pneg %p63
        %p200 = pneg %p60
        %p201 = pneg %p84
        %p202 = pneg %p81
        %p203 = pneg %p110
        %p204 = pneg %p107
        %s205 = sand.u32 %s97, 1
        %s206 = scalar_lea.sflag [#allocation4], %s205
        %s207 = sand.u32 %s97, 1
        %s208 = smul.addr %s207, 16
        %s209 = scalar_lea.vmem [#allocation7], %s208
        %s210 = smul.u32 2, %s21
        %s211 = ssub.s32 3, %s210
        %p212 = scmp.lt.s32.totalorder %s211, 2
        %s213 = scalar_select %p212, %s211, 2
        %s214 = smul.u32 128, %s213
        %s215 = smul.u32 2, %s21
        %s216 = ssub.s32 3, %s215
        %p217 = scmp.lt.s32.totalorder %s216, 2
        %s218 = scalar_select %p217, %s216, 2
        %s219 = smul.u32 128, %s218
        %v221 = vld [vmem:[%s183] sm:$0xff]
        %v222 = vld [vmem:[%s183 + $0x8] sm:$0xff]
        %v223 = vpack.c.bf16 %v222, %v221
        %v224 = vld [vmem:[#allocation5] sm:$0xf]
        %v225 = vld [vmem:[#allocation5 + $0x4] sm:$0xf]
        %v226 = vld [vmem:[#allocation5 + $0x8] sm:$0xf]
        %v227 = vld [vmem:[#allocation5 + $0xc] sm:$0xf]
        %v228 = vld [vmem:[%s2] sm:$0x1]
        %v230 = vlaneseq
        %v231 = vshrl.u32 %v230, 7
        %v232 = vsub.s32 0, %v231
        %v233 = vrot.slane %v228, %v232
        %v239 = vunpack.c.l.b16 %v224
        %v240 = vunpack.c.l.b16 %v225
        %v241 = vunpack.c.l.b16 %v226
        %v242 = vunpack.c.l.b16 %v227
        %v243 = vpack.c.b16 %v240, %v239
        %v244 = vpack.c.b16 %v242, %v241
        %vm247 = vcmask 261120
        %v249 = vsel %vm247, %v223, 0
        %251 = vmatprep.subr.bf16.mxu0 0
        %252 = vmatpush1.bf16.msra.mxu0 %v243
        %253 = vmatprep.subr.bf16.mxu0 0
        %254 = vmatpush1.bf16.msra.mxu0 %v244
        %255 = vmatprep.subr.bf16.mxu0 0
        %256 = vmatpush1.bf16.msra.mxu0 0
        %257 = vmatprep.subr.bf16.mxu0 0
        %258 = vmatpush1.bf16.msra.mxu0 0
        %259 = vmatprep.subr.bf16.mxu0 0
        %260 = vmatpush1.bf16.msra.mxu0 0
        %261 = vmatprep.subr.bf16.mxu0 0
        %262 = vmatpush1.bf16.msra.mxu0 0
        %263 = vmatprep.subr.bf16.mxu0 0
        %264 = vmatpush1.bf16.msra.mxu0 0
        %265 = vmatprep.subr.bf16.mxu0 0
        %266 = vmatpush1.bf16.msra.mxu0 0
        %267 = vmatprep.subr.bf16.mxu0 0
        %268 = vmatpush1.bf16.msra.mxu0 0
        %269 = vmatprep.subr.bf16.mxu0 0
        %270 = vmatpush1.bf16.msra.mxu0 0
        %271 = vmatprep.subr.bf16.mxu0 0
        %272 = vmatpush1.bf16.msra.mxu0 0
        %273 = vmatprep.subr.bf16.mxu0 0
        %274 = vmatpush1.bf16.msra.mxu0 0
        %275 = vmatprep.subr.bf16.mxu0 0
        %276 = vmatpush1.bf16.msra.mxu0 0
        %277 = vmatprep.subr.bf16.mxu0 0
        %278 = vmatpush1.bf16.msra.mxu0 0
        %279 = vmatprep.subr.bf16.mxu0 0
        %280 = vmatpush1.bf16.msra.mxu0 0
        %281 = vmatprep.subr.bf16.mxu0 0
        %282 = vmatpush1.bf16.msra.mxu0 0
        %283 = vmatprep.mubr.bf16.mxu0 0
        %284 = vmatmul.mubr.bf16.gmra.mrb[0].mxu0 %v249
        %v285 = vpop.f32.mrb[0].mxu0
        %v286 = vadd.f32 %v233, %v285
        %v287 = vpop.f32.mrb[0].mxu0
        %v288 = vpop.f32.mrb[0].mxu0
        %v289 = vadd.f32 %v233, %v288
        %v290 = vpop.f32.mrb[0].mxu0
        %291 = vdwg.mxu0
        %292 = vmax.xlane.f32.xlu0 %v286
        %v293 = vpop.xlane.xlu0 %292
        %294 = vmax.xlane.f32.xlu0 %v289
        %v295 = vpop.xlane.xlu0 %294
        %v296 = vsub.f32 %v286, %v293
        %v297 = vsub.f32 %v289, %v295
        %v298 = vmul.f32 %v296, 1.442695
        %v299 = vpow.pop %v298
        %v300 = vmul.f32 %v297, 1.442695
        %v301 = vpow.pop %v300
        %302 = vadd.xlane.f32.xlu0 %v299
        %v303 = vpop.xlane.xlu0 %302
        %304 = vadd.xlane.f32.xlu0 %v301
        %v305 = vpop.xlane.xlu0 %304
        %v306 = vlog2.pop %v303
        %v307 = vmul.f32 %v306, 0.6931472
        %v308 = vlog2.pop %v305
        %v309 = vmul.f32 %v308, 0.6931472
        %v310 = vsub.f32 %v296, %v307
        %v311 = vsub.f32 %v297, %v309
        %312 = vst [vmem:[%s209] sm:$0xff] %v310
        %313 = vst [vmem:[%s209 + $0x8] sm:$0xff] %v311
        %s314 = sand.u32 %s97, 1
        %s315 = scalar_lea.sflag [#allocation4], %s314
        %s316 = sand.u32 %s97, 1
        %s317 = smul.addr %s316, 16
        %s318 = scalar_lea.vmem [#allocation7], %s317
        // Predicated region
        $region41: #{tpu_custom_call.1} parent=31 // pred_check
          %p319 = pneg %p107
        $region42: #{tpu_custom_call.1} parent=31 // pred_check_branch
          %321 = sbr.rel (%p319) target = $region44
        $region43: #{tpu_custom_call.1} parent=31 // pred_region
          %s322 = smul.u32 2, %s21
          %s323 = ssub.s32 3, %s322
          %p324 = scmp.lt.s32.totalorder %s323, 2
          %s325 = scalar_select %p324, %s323, 2
          %s326 = smul.u32 128, %s325
          %s328 = ssub.s32 256, %s326
          %329 = vsyncadd %s315, %s328
          %p330 = scmp.ne.s32.totalorder 0, %s326
          %s331 = smul.addr %s322, 128
          %s332 = scalar_lea.hbm %s3, %s331
          %s333 = smul.u32 8, %s325
          %s334 = sshll.u32 %s318, 4
          %s335 = int_to_ptr.vmem [resolvable:$true] %s334
          %s336 = sshll.u32 %s333, 4
          %340 = dma.vmem_to_hbm [thread:$0]  (%p330), %s335, %s336, %s332, %s315, 128, 128, 8
        $region44: #{tpu_custom_call.1} parent=31 // pred_fallthru
          _
      $region32: #{tpu_custom_call.1} parent=5 // pred_fallthru
        _
      %p341 = scmp.le.s32.totalorder 2, %s16
      // Predicated region
      $region45: #{tpu_custom_call.1} parent=5 // pred_check
        %p342 = pneg %p341
      $region46: #{tpu_custom_call.1} parent=5 // pred_check_branch
        %344 = sbr.rel (%p342) target = $region48
      $region47: #{tpu_custom_call.1} parent=5 // pred_region
        %s345 = ssub.s32 %s16, 2
        // Predicated region
        $region49: #{tpu_custom_call.1} parent=47 // pred_check
          %p346 = pneg %p113
        $region50: #{tpu_custom_call.1} parent=47 // pred_check_branch
          %348 = sbr.rel (%p346) target = $region52
        $region51: #{tpu_custom_call.1} parent=47 // pred_region
          %s349 = sand.u32 %s98, 1
          %s350 = scalar_lea.sflag [#allocation4], %s349
          %s351 = sand.u32 %s98, 1
          %s352 = smul.addr %s351, 16
          %s353 = scalar_lea.vmem [#allocation7], %s352
          %354 = dma.done %s350, 256
        $region52: #{tpu_custom_call.1} parent=47 // pred_fallthru
          _
      $region48: #{tpu_custom_call.1} parent=5 // pred_fallthru
        _
    $region6: #{tpu_custom_call.1} parent=1 // loop_footer
      %s20 = sadd.s32 1, %s16
    $region7: #{tpu_custom_call.1} parent=1 // loop_footer_branch
      %15 = sbr.rel target = $region3
    $region8: #{tpu_custom_call.1} parent=1 // loop_exit
      _
    %355 = vsyncpa [#allocation3], 1
    %s356 = scalar_lea.sflag [#allocation3], 1
    %357 = vsyncpa %s356, 1
    %358 = vsyncpa [#allocation6], 1
    %359 = vsyncpa [#allocation4], 1
    %s360 = scalar_lea.sflag [#allocation4], 1
    %361 = vsyncpa %s360, 1

</llo_original>
